<compile_context>
chip_gen: v6e
topology: v6e:2x2x1
jax: 0.10.0
libtpu: 0.0.40
codegen_flags: <defaults>
</compile_context>

<pallas_src>
import jax
import jax.numpy as jnp
from jax import lax
from jax.experimental import pallas as pl
from jax.experimental.pallas import tpu as pltpu


def highlight_kernel(x_ref, w_ref, b_ref, mask_ref, out_ref):
    # x_ref:    (tN, D)  VMEM   current slab of flattened (batch*seq) rows
    # w_ref:    (1, D)   VMEM   conv1d weight as a lane-dense row
    # b_ref:    (1, 1)   SMEM   conv1d bias (scalar)
    # mask_ref: (1, tN)  VMEM   mask slice (native dtype)
    # out_ref:  (1, tN)  VMEM   lane-dense scores row
    #
    # (1,D) . (tN,D)^T contracted over D -> (1, tN): the result is lane-dense
    # along the row axis, so the store is a full-width vst and the writeback
    # DMA is wide.
    logits = lax.dot_general(
        w_ref[...], x_ref[...],
        dimension_numbers=(((1,), (1,)), ((), ())),
        preferred_element_type=jnp.float32,
    )                                               # (1, tN)
    logits = logits + b_ref[0, 0]
    m = mask_ref[...].astype(jnp.float32)           # cast in-kernel (narrow HBM read)
    logits = logits + (1.0 - m) * (-1e30)           # exact mask_logits semantics
    out_ref[...] = jax.nn.sigmoid(logits).astype(out_ref.dtype)


def _round_up(a, b):
    return ((a + b - 1) // b) * b


def _choose_row_tile(N, D, itemsize, target_bytes=6 * 1024 * 1024):
    """Row tile tN for the flattened (N, D) input.

    Sized by bytes (not a fixed row cap), accounting for lane padding of the
    feature axis (a row occupies round_up(D, 128) lanes of VMEM).  Multiple of
    128 so the (tN, D) x block and the (1, tN) mask/out blocks satisfy the
    (8, 128) tiling rule; prefers a tile that divides N evenly to avoid a
    masked remainder step.
    """
    if N <= 128:
        return N                                    # full-extent block is always legal
    row_bytes = _round_up(D, 128) * itemsize        # lane-padded VMEM footprint per row
    rows = (target_bytes // row_bytes) // 128 * 128
    rows = max(128, rows)
    rows = min(rows, (N // 128) * 128)              # never exceed the usable extent
    # Prefer an even divisor of N (no remainder tile / no masked last stores).
    t = rows
    while t >= 128:
        if N % t == 0:
            return t
        t -= 128
    return rows


def highlight_layer(x, mask, weight, bias):
    """x: (B, T, D), mask: (B, T), weight: (D, 1), bias: (1,) -> (B, T) f32."""
    B, T, D = x.shape
    N = B * T

    x2 = x.reshape(N, D)                            # contiguous reshape, free
    mask2 = mask.reshape(1, N)                      # native dtype; cast in kernel
    w_row = weight.reshape(1, D).astype(x.dtype)    # lane-dense weight row
    b_smem = bias.reshape(1, 1).astype(jnp.float32) # scalar -> SMEM

    tN = _choose_row_tile(N, D, x.dtype.itemsize)
    grid = (pl.cdiv(N, tN),)

    bytes_accessed = (
        N * D * x.dtype.itemsize        # x read
        + N * mask.dtype.itemsize       # mask read
        + N * 4                         # scores write (f32)
        + D * x.dtype.itemsize          # weight
    )

    out = pl.pallas_call(
        highlight_kernel,
        out_shape=jax.ShapeDtypeStruct((1, N), jnp.float32),
        grid_spec=pltpu.PrefetchScalarGridSpec(
            num_scalar_prefetch=0,
            grid=grid,
            in_specs=[
                pl.BlockSpec((tN, D), lambda i: (i, 0)),                # x rows
                pl.BlockSpec((1, D), lambda i: (0, 0)),                 # weight row
                pl.BlockSpec(memory_space=pltpu.MemorySpace.SMEM),      # bias scalar
                pl.BlockSpec((1, tN), lambda i: (0, i)),                # mask
            ],
            out_specs=pl.BlockSpec((1, tN), lambda i: (0, i)),          # scores
        ),
        compiler_params=pltpu.CompilerParams(
            dimension_semantics=("parallel",),
            vmem_limit_bytes=32 * 1024 * 1024,
        ),
        cost_estimate=pl.CostEstimate(
            flops=2 * N * D,
            transcendentals=N,
            bytes_accessed=bytes_accessed,
        ),
    )(x2, w_row, b_smem, mask2)
    return out.reshape(B, T)


def reference(x, mask, weight, bias):
    logits = jnp.einsum("btd,do->bto", x, weight)[..., 0] + bias[0]
    logits = logits + (1.0 - mask.astype(jnp.float32)) * (-1e30)
    return jax.nn.sigmoid(logits)


# TODO(synk): HighLightLayer.compute_loss (masked weighted BCE) is a training
# helper, not part of forward(); it is left to plain JAX and not kernelized.


if __name__ == "__main__":
    B, T, D = 2, 16, 32
    key = jax.random.PRNGKey(0)
    kx, kw, kb = jax.random.split(key, 3)

    x = jax.random.normal(kx, (B, T, D), dtype=jnp.float32)
    # Deterministic "Conv1d(dim, 1, kernel_size=1)" parameters.
    bound = 1.0 / (D ** 0.5)
    weight = jax.random.uniform(kw, (D, 1), minval=-bound, maxval=bound,
                                dtype=jnp.float32)
    bias = jax.random.uniform(kb, (1,), minval=-bound, maxval=bound,
                              dtype=jnp.float32)
    # Binary mask with the tail of the second sequence masked out.
    mask = (jnp.arange(T)[None, :] < jnp.array([[T], [T - 4]])).astype(jnp.float32)

    scores = highlight_layer(x, mask, weight, bias)
    scores = jax.block_until_ready(scores)

    ref = reference(x, mask, weight, bias)
    assert scores.shape == (B, T)
    assert jnp.allclose(scores, ref, atol=1e-5, rtol=1e-5), "mismatch vs reference"

    print("KERNEL_OK")
</pallas_src>

<mosaic_0001>
module attributes {stable_mosaic.version = 11 : i64} {
  func.func @highlight_kernel(%arg0: i32, %arg1: memref<32x32xf32, #tpu.memory_space<vmem>>, %arg2: memref<1x32xf32, #tpu.memory_space<vmem>>, %arg3: memref<1x1xf32, #tpu.memory_space<smem>>, %arg4: memref<1x32xf32, #tpu.memory_space<vmem>>, %arg5: memref<1x32xf32, #tpu.memory_space<vmem>>) attributes {dimension_semantics = [#tpu.dimension_semantics<parallel>], iteration_bounds = array<i64: 1>, scalar_prefetch = 0 : i64, scratch_operands = 0 : i64, tpu.core_type = #tpu.core_type<tc>, window_params = [{transform_indices = @transform_0, window_bounds = array<i64: 32, 32>}, {pipeline_mode = #tpu.pipeline_mode<synchronous>, transform_indices = @transform_1, window_bounds = array<i64: 1, 32>}, {transform_indices = @transform_2, window_bounds = array<i64: 1, 1>}, {transform_indices = @transform_3, window_bounds = array<i64: 1, 32>}, {transform_indices = @transform_4, window_bounds = array<i64: 1, 32>}]} {
    %c0 = arith.constant 0 : index
    %c0_0 = arith.constant 0 : index
    %0 = vector.load %arg2[%c0, %c0_0] : memref<1x32xf32, #tpu.memory_space<vmem>>, vector<1x32xf32>
    %c0_1 = arith.constant 0 : index
    %c0_2 = arith.constant 0 : index
    %1 = vector.load %arg1[%c0_1, %c0_2] : memref<32x32xf32, #tpu.memory_space<vmem>>, vector<32x32xf32>
    %cst = arith.constant dense<0.000000e+00> : vector<1x32xf32>
    %2 = tpu.matmul %0, %1, %cst {dimension_numbers = #tpu.dot_dimension_numbers<[1], [1], [0], [0], [0, 0, 1, 0], [], []>} : vector<1x32xf32>, vector<32x32xf32>, vector<1x32xf32> -> vector<1x32xf32>
    %c0_3 = arith.constant 0 : index
    %c0_4 = arith.constant 0 : index
    %3 = memref.load %arg3[%c0_3, %c0_4] : memref<1x1xf32, #tpu.memory_space<smem>>
    %4 = vector.broadcast %3 : f32 to vector<1x32xf32>
    %5 = arith.addf %2, %4 : vector<1x32xf32>
    %c0_5 = arith.constant 0 : index
    %c0_6 = arith.constant 0 : index
    %6 = vector.load %arg4[%c0_5, %c0_6] : memref<1x32xf32, #tpu.memory_space<vmem>>, vector<1x32xf32>
    %cst_7 = arith.constant 1.000000e+00 : f32
    %7 = vector.broadcast %cst_7 : f32 to vector<1x32xf32>
    %8 = arith.subf %7, %6 : vector<1x32xf32>
    %cst_8 = arith.constant -1.000000e+30 : f32
    %9 = vector.broadcast %cst_8 : f32 to vector<1x32xf32>
    %10 = arith.mulf %8, %9 : vector<1x32xf32>
    %11 = arith.addf %5, %10 : vector<1x32xf32>
    %12 = arith.negf %11 : vector<1x32xf32>
    %13 = math.exp %12 : vector<1x32xf32>
    %cst_9 = arith.constant 1.000000e+00 : f32
    %14 = vector.broadcast %cst_9 : f32 to vector<1x32xf32>
    %15 = arith.addf %14, %13 : vector<1x32xf32>
    %16 = arith.divf %14, %15 : vector<1x32xf32>
    %c0_10 = arith.constant 0 : index
    %c0_11 = arith.constant 0 : index
    %17 = vector.load %arg5[%c0_10, %c0_11] : memref<1x32xf32, #tpu.memory_space<vmem>>, vector<1x32xf32>
    tpu.vector_store %arg5[%c0_10, %c0_11], %16 {strides = array<i32>} : memref<1x32xf32, #tpu.memory_space<vmem>>, vector<1x32xf32>,
    return
  }
  func.func @transform_0(%arg0: i32) -> (i32, i32) {
    %c0_i32 = arith.constant 0 : i32
    %c0_i32_0 = arith.constant 0 : i32
    return %arg0, %c0_i32 : i32, i32
  }
  func.func @transform_1(%arg0: i32) -> (i32, i32) {
    %c0_i32 = arith.constant 0 : i32
    %c0_i32_0 = arith.constant 0 : i32
    %c0_i32_1 = arith.constant 0 : i32
    return %c0_i32, %c0_i32_0 : i32, i32
  }
  func.func @transform_2(%arg0: i32) -> (i32, i32) {
    %c0_i32 = arith.constant 0 : i32
    %c0_i32_0 = arith.constant 0 : i32
    %c0_i32_1 = arith.constant 0 : i32
    return %c0_i32, %c0_i32_0 : i32, i32
  }
  func.func @transform_3(%arg0: i32) -> (i32, i32) {
    %c0_i32 = arith.constant 0 : i32
    %c0_i32_0 = arith.constant 0 : i32
    return %c0_i32, %arg0 : i32, i32
  }
  func.func @transform_4(%arg0: i32) -> (i32, i32) {
    %c0_i32 = arith.constant 0 : i32
    %c0_i32_0 = arith.constant 0 : i32
    return %c0_i32, %arg0 : i32, i32
  }
}

</mosaic_0001>

<llo_original>
// kernel: tpu_custom_call.1
$region0: #{tpu_custom_call.1}
  #allocation0 [shape = 'u32[]', space=smem, size = 0x4, offset = 0x4, fixed_abs, tag = 'smem constant byte address 0x4 - core index']
  #allocation1 [shape = 'u32[144,128]{1,0:T(1,128)}', space=vmem, size = 0x12000, scoped, tag = 'internal scratch']
  #allocation2 [shape = 'f32[1,1]{1,0:T(1,128)S(6)}', space=smem, size = 0x200, scoped, tag = 'scoped memory for tpu_custom_call.1']
  %s0 = inlined_call_operand.hbm [shape: f32[32,32], index: 0, kind: input, shape index: {}]
  %s1 = inlined_call_operand.vmem [shape: f32[1,32], index: 1, kind: input, shape index: {}]
  %s2 = inlined_call_operand.<no memory space> [shape: f32[1,1], index: 2, kind: input, shape index: {}]
  %s3 = inlined_call_operand.vmem [shape: f32[1,32], index: 3, kind: input, shape index: {}]
  %s4 = inlined_call_operand.hbm [shape: f32[1,32], index: 4, kind: output, shape index: {}]
  %s5 = sld [smem:[#allocation0]]
  $region30: #{tpu_custom_call.1} parent=0
    _
  %s7 = ssub.s32 1, %s5
  %s8 = scalar_select 0, %s7, %s5
  %9 = sst [smem:[#allocation2]] %s2
  $region1: #{tpu_custom_call.1} parent=0
    #allocation3 [shape = 'u8[16384]{0}', space=vmem, size = 0x4000, scoped, tag = 'input window, operand 0, single buffered']
    #allocation4 [shape = 's32[1]{0}', space=sflag, size = 0x4, scoped, tag = 'scoped memory for tpu_custom_call.1']
    #allocation5 [shape = 's32[1]{0}', space=sflag, size = 0x4, scoped, tag = 'scoped memory for tpu_custom_call.1']
    #allocation6 [shape = 'u8[512]{0}', space=vmem, size = 0x400, scoped, tag = 'output window, operand 0, single buffered']
    %10 = vsyncpa [#allocation4], 0
    %11 = vsyncpa [#allocation5], 0
    // Predicated region
    $region2: #{tpu_custom_call.1} parent=1 // pred_check
      _
    $region3: #{tpu_custom_call.1} parent=1 // pred_check_branch
      %13 = sbr.rel (0) target = $region5
    $region4: #{tpu_custom_call.1} parent=1 // pred_region
      %s15 = ssub.s32 512, 512
      %16 = vsyncadd [#allocation4], %s15
      %s17 = sshll.u32 [#allocation3], 4
      %s18 = int_to_ptr.vmem [resolvable:$true] %s17
      %23 = dma.hbm_to_vmem [thread:$0]  %s0, 512, %s18, [#allocation4], 128, 128, 8
    $region5: #{tpu_custom_call.1} parent=1 // pred_fallthru
      _
    // Predicated region
    $region6: #{tpu_custom_call.1} parent=1 // pred_check
      _
    $region7: #{tpu_custom_call.1} parent=1 // pred_check_branch
      %25 = sbr.rel (0) target = $region9
    $region8: #{tpu_custom_call.1} parent=1 // pred_region
      _
    $region9: #{tpu_custom_call.1} parent=1 // pred_fallthru
      _
    // Predicated region
    $region10: #{tpu_custom_call.1} parent=1 // pred_check
      _
    $region11: #{tpu_custom_call.1} parent=1 // pred_check_branch
      %27 = sbr.rel (0) target = $region13
    $region12: #{tpu_custom_call.1} parent=1 // pred_region
      _
    $region13: #{tpu_custom_call.1} parent=1 // pred_fallthru
      _
    // Predicated region
    $region14: #{tpu_custom_call.1} parent=1 // pred_check
      _
    $region15: #{tpu_custom_call.1} parent=1 // pred_check_branch
      %29 = sbr.rel (0) target = $region17
    $region16: #{tpu_custom_call.1} parent=1 // pred_region
      _
    $region17: #{tpu_custom_call.1} parent=1 // pred_fallthru
      _
    // Predicated region
    $region18: #{tpu_custom_call.1} parent=1 // pred_check
      _
    $region19: #{tpu_custom_call.1} parent=1 // pred_check_branch
      %31 = sbr.rel (0) target = $region21
    $region20: #{tpu_custom_call.1} parent=1 // pred_region
      %32 = dma.done [#allocation4], 512
    $region21: #{tpu_custom_call.1} parent=1 // pred_fallthru
      _
    %v33 = vld [vmem:[%s1] sm:$0x1]
    %v34 = vld [vmem:[#allocation3] sm:$0xff]
    %v35 = vld [vmem:[#allocation3 + $0x8] sm:$0xff]
    %v36 = vld [vmem:[#allocation3 + $0x10] sm:$0xff]
    %v37 = vld [vmem:[#allocation3 + $0x18] sm:$0xff]
    %s38 = sld [smem:[#allocation2]]
    %v39 = vstv %s38
    %vm40 = vcmask 261120
    %v42 = vsel %vm40, %v33, 0
    %v45 = vsel %vm40, %v34, 0
    %v48 = vsel %vm40, %v35, 0
    %v51 = vsel %vm40, %v36, 0
    %v54 = vsel %vm40, %v37, 0
    %56 = vmatprep.subr.mxu0 0.0
    %57 = vmatpush1.xpose.msra.mxu0 0.0
    %58 = vmatprep.subr.mxu0 0.0
    %59 = vmatpush1.xpose.msra.mxu0 0.0
    %60 = vmatprep.subr.mxu0 0.0
    %61 = vmatpush1.xpose.msra.mxu0 0.0
    %62 = vmatprep.subr.mxu0 0.0
    %63 = vmatpush1.xpose.msra.mxu0 0.0
    %64 = vmatprep.subr.mxu0 0.0
    %65 = vmatpush1.xpose.msra.mxu0 0.0
    %66 = vmatprep.subr.mxu0 0.0
    %67 = vmatpush1.xpose.msra.mxu0 0.0
    %68 = vmatprep.subr.mxu0 0.0
    %69 = vmatpush1.xpose.msra.mxu0 0.0
    %70 = vmatprep.subr.mxu0 0.0
    %71 = vmatpush1.xpose.msra.mxu0 0.0
    %72 = vmatprep.subr.mxu0 0.0
    %73 = vmatpush1.xpose.msra.mxu0 0.0
    %74 = vmatprep.subr.mxu0 0.0
    %75 = vmatpush1.xpose.msra.mxu0 0.0
    %76 = vmatprep.subr.mxu0 0.0
    %77 = vmatpush1.xpose.msra.mxu0 0.0
    %78 = vmatprep.subr.mxu0 0.0
    %79 = vmatpush1.xpose.msra.mxu0 0.0
    %80 = vmatprep.subr.mxu0 0.0
    %81 = vmatpush1.xpose.msra.mxu0 %v54
    %82 = vmatprep.subr.mxu0 0.0
    %83 = vmatpush1.xpose.msra.mxu0 %v51
    %84 = vmatprep.subr.mxu0 0.0
    %85 = vmatpush1.xpose.msra.mxu0 %v48
    %86 = vmatprep.subr.mxu0 0.0
    %87 = vmatpush1.xpose.msra.mxu0 %v45
    %88 = vmatprep.subr.mxu0 0.0
    %89 = vmatpush2.xpose.msra.mxu0 0.0
    %90 = vmatprep.subr.mxu0 0.0
    %91 = vmatpush2.xpose.msra.mxu0 0.0
    %92 = vmatprep.subr.mxu0 0.0
    %93 = vmatpush2.xpose.msra.mxu0 0.0
    %94 = vmatprep.subr.mxu0 0.0
    %95 = vmatpush2.xpose.msra.mxu0 0.0
    %96 = vmatprep.subr.mxu0 0.0
    %97 = vmatpush2.xpose.msra.mxu0 0.0
    %98 = vmatprep.subr.mxu0 0.0
    %99 = vmatpush2.xpose.msra.mxu0 0.0
    %100 = vmatprep.subr.mxu0 0.0
    %101 = vmatpush2.xpose.msra.mxu0 0.0
    %102 = vmatprep.subr.mxu0 0.0
    %103 = vmatpush2.xpose.msra.mxu0 0.0
    %104 = vmatprep.subr.mxu0 0.0
    %105 = vmatpush2.xpose.msra.mxu0 0.0
    %106 = vmatprep.subr.mxu0 0.0
    %107 = vmatpush2.xpose.msra.mxu0 0.0
    %108 = vmatprep.subr.mxu0 0.0
    %109 = vmatpush2.xpose.msra.mxu0 0.0
    %110 = vmatprep.subr.mxu0 0.0
    %111 = vmatpush2.xpose.msra.mxu0 0.0
    %112 = vmatprep.subr.mxu0 0.0
    %113 = vmatpush2.xpose.msra.mxu0 0.0
    %114 = vmatprep.subr.mxu0 0.0
    %115 = vmatpush2.xpose.msra.mxu0 0.0
    %116 = vmatprep.subr.mxu0 0.0
    %117 = vmatpush2.xpose.msra.mxu0 0.0
    %118 = vmatprep.subr.mxu0 0.0
    %119 = vmatpush2.xpose.msra.mxu0 0.0
    %120 = vmatprep.mubr.f32.mxu0 0.0
    %121 = vmatmul.mubr.f32.gmra.mxu0 %v42
    %v122 = vpop.f32.mrf.mxu0
    %v123 = vadd.f32 %v39, %v122
    %v124 = vpop.f32.mrf.mxu0
    %125 = vdwg.mxu0
    %v126 = vld [vmem:[%s3] sm:$0x1]
    %v127 = vsub.f32 1.0, %v126
    %v128 = vmul.f32 %v127, -1e+30
    %v129 = vadd.f32 %v123, %v128
    %v130 = vxor.u32 %v129, 2147483648
    %v131 = vmul.f32 %v130, 1.442695
    %v132 = vpow.pop %v131
    %v133 = vadd.f32 %v132, 1.0
    %v134 = vrcp.pop %v133
    %v135 = vmul.f32 1.0, %v134
    %vm136 = vcmask 253952
    %137 = vst.msk [vmem:[#allocation6] sm:$0x1] %vm136, %v135
    // Predicated region
    $region22: #{tpu_custom_call.1} parent=1 // pred_check
      _
    $region23: #{tpu_custom_call.1} parent=1 // pred_check_branch
      %139 = sbr.rel (0) target = $region25
    $region24: #{tpu_custom_call.1} parent=1 // pred_region
      %s141 = ssub.s32 16, 16
      %142 = vsyncadd [#allocation5], %s141
      %s144 = sshll.u32 [#allocation6], 4
      %s145 = int_to_ptr.vmem [resolvable:$true] %s144
      %147 = dma.vmem_to_hbm [thread:$0]  %s145, 16, %s4, [#allocation5]
    $region25: #{tpu_custom_call.1} parent=1 // pred_fallthru
      _
    // Predicated region
    $region26: #{tpu_custom_call.1} parent=1 // pred_check
      _
    $region27: #{tpu_custom_call.1} parent=1 // pred_check_branch
      %149 = sbr.rel (0) target = $region29
    $region28: #{tpu_custom_call.1} parent=1 // pred_region
      %150 = dma.done [#allocation5], 16
    $region29: #{tpu_custom_call.1} parent=1 // pred_fallthru
      _
    %151 = vsyncpa [#allocation4], 1
    %152 = vsyncpa [#allocation5], 1

</llo_original>
